<compile_context>
chip_gen: v7x
topology: tpu7x:2x2x1
jax: 0.10.0
libtpu: 0.0.40
codegen_flags: <defaults>
</compile_context>

<pallas_src>
import functools

import jax
import jax.numpy as jnp
from jax.experimental import pallas as pl
from jax.experimental.pallas import tpu as pltpu


def relax_baseline_kernel(x_ref, w1_ref, b1_ref, w2_ref, b2_ref, w3_ref, b3_ref,
                          o_ref, *, layer3_mxu):
    # ---- layer 1: (tile, D) @ (D, 128) on the MXU (bf16 operands, f32 accum) ----
    x = x_ref[...]
    if x.dtype != jnp.bfloat16:        # skip the cast when the caller feeds bf16
        x = x.astype(jnp.bfloat16)
    h = jnp.dot(x, w1_ref[...], preferred_element_type=jnp.float32)
    h = jnp.maximum(h + b1_ref[...], 0.0)                 # bias + ReLU in f32

    # ---- layer 2: (tile, 128) @ (128, 128) on the MXU ----
    h = jnp.dot(h.astype(jnp.bfloat16), w2_ref[...],
                preferred_element_type=jnp.float32)
    h = jnp.maximum(h + b2_ref[...], 0.0)

    # ---- layer 3 (out_features == 1) ----
    if layer3_mxu:
        # dot_general contracting the lane axes: (8,128) x (tile,128) -> (8,tile).
        # Produces the lane-dense (1, tile) row natively (no XLU column->row
        # relayout); with M=8 it costs ~1/16 of layer 2's MXU pushes.
        out = jax.lax.dot_general(
            w3_ref[...], h.astype(jnp.bfloat16),
            dimension_numbers=(((1,), (1,)), ((), ())),
            preferred_element_type=jnp.float32)
        out = out[0:1, :] + b3_ref[0]                     # rows 1..7 of w3 are zero
    else:
        # v5e path: VPU multiply + XLU lane reduce keeps the MXU free (v5e's
        # 4x128x128 MXU is exactly matched by the 128-wide layers above).
        out = jnp.sum(h * w3_ref[...], axis=-1) + b3_ref[0]

    # Lane-dense store: the output block is (1, 1, tile).
    o_ref[...] = out.reshape(o_ref.shape)


def _device_kind():
    try:
        return jax.devices()[0].device_kind.lower()
    except Exception:
        return ""


def _is_v5e(kind):
    return ("v5e" in kind) or ("v5 lite" in kind) or ("v5litepod" in kind)


def _default_vmem_limit(kind):
    cap = 0
    try:
        cap = int(getattr(pltpu.get_tpu_info(), "vmem_capacity_bytes", 0) or 0)
    except Exception:
        cap = 0
    if cap <= 0:
        cap = 64 * 1024 * 1024         # conservative: v7x per-TensorCore VMEM
    limit = min(cap * 3 // 4, 100 * 1024 * 1024)
    if "7" in kind:                    # v7x: only 64 MiB physical per TensorCore
        limit = min(limit, 48 * 1024 * 1024)
    return int(limit)


def _round_up(n, m):
    return -(-n // m) * m


def relax_baseline_forward(x, params, *, tile_b=1024, vmem_limit_bytes=None,
                           layer3_mxu=None):
    """Forward pass of RELAXBaseline.  x: (B, D) -> (B, 1) float32."""
    B, D = x.shape
    H = params["w1"].shape[1]          # 128

    kind = _device_kind()
    if layer3_mxu is None:
        layer3_mxu = not _is_v5e(kind)         # review: keep the VPU path on v5e
    if vmem_limit_bytes is None:
        vmem_limit_bytes = _default_vmem_limit(kind)

    # ---- kernel operands (weights pre-cast once in init_params when possible) ----
    w1 = params["w1_bf16"] if "w1_bf16" in params else params["w1"].astype(jnp.bfloat16)
    w2 = params["w2_bf16"] if "w2_bf16" in params else params["w2"].astype(jnp.bfloat16)
    if layer3_mxu:
        if "w3_mxu" in params:
            w3 = params["w3_mxu"]                              # (8, H) bf16, rows 1..7 zero
        else:
            w3 = jnp.zeros((8, H), jnp.bfloat16).at[0, :].set(
                params["w3"].reshape(H).astype(jnp.bfloat16))
    else:
        w3 = params["w3"].reshape(1, H).astype(jnp.float32)    # f32 row, VPU path
    b1 = params["b1"].reshape(1, H)
    b2 = params["b2"].reshape(1, H)
    b3 = params["b3"].reshape(1)

    # ---- batch tile: largest VMEM-budgeted, lane/MXU-friendly tile ----
    itemsize = jnp.dtype(x.dtype).itemsize
    row_align = max(8, 32 // itemsize)           # f32: 8 rows, bf16: 16, int8: 32
    per_row = (2 * D * itemsize                  # double-buffered x tile
               + (D * 2 if x.dtype != jnp.bfloat16 else 0)   # in-kernel bf16 copy
               + 2 * H * 4                       # two live f32 activations
               + 2 * 4)                          # double-buffered output row
    fixed = 2 * (D * H * 2 + H * H * 2 + 4 * H * 4) + (2 << 20)  # weights + headroom
    avail = max(vmem_limit_bytes - fixed, per_row * row_align)
    max_rows = max(row_align, avail // per_row)

    tile = int(min(tile_b, max_rows))
    if B >= 256:
        # >= 2 grid steps so v7x's two TensorCores both get work on the
        # ("parallel",) batch axis; negligible cost on single-core chips.
        tile = min(tile, -(-B // 2))
    if tile >= B:
        tile = _round_up(B, row_align)           # single step (ragged rows read OOB)
        grid_b = 1
    else:
        if tile >= 128:
            tile = (tile // 128) * 128           # lane-aligned multi-step tile
        else:
            # Huge-D fallback: stay within the VMEM budget; stores remain
            # lane-dense because the output block's last dim equals the array's.
            tile = max(row_align, (tile // row_align) * row_align)
        grid_b = -(-B // tile)
    b_pad = grid_b * tile                        # only the tiny output is oversized

    out = pl.pallas_call(
        functools.partial(relax_baseline_kernel, layer3_mxu=layer3_mxu),
        out_shape=jax.ShapeDtypeStruct((grid_b, 1, tile), jnp.float32),
        grid_spec=pltpu.PrefetchScalarGridSpec(
            num_scalar_prefetch=0,
            grid=(grid_b,),
            in_specs=[
                pl.BlockSpec((tile, D), lambda i: (i, 0)),   # x tile over batch
                # Grid-index-invariant blocks: DMA'd once, stay resident in VMEM.
                pl.BlockSpec((D, H), lambda i: (0, 0)),      # W1 (bf16)
                pl.BlockSpec((1, H), lambda i: (0, 0)),      # b1 (f32)
                pl.BlockSpec((H, H), lambda i: (0, 0)),      # W2 (bf16)
                pl.BlockSpec((1, H), lambda i: (0, 0)),      # b2 (f32)
                pl.BlockSpec(w3.shape, lambda i: (0, 0)),    # w3 row(s)
                pl.BlockSpec(memory_space=pltpu.MemorySpace.SMEM),  # b3 scalar
            ],
            out_specs=pl.BlockSpec((1, 1, tile), lambda i: (i, 0, 0)),  # lane-dense
        ),
        compiler_params=pltpu.CompilerParams(
            dimension_semantics=("parallel",),
            vmem_limit_bytes=int(vmem_limit_bytes),
        ),
    )(x, w1, b1, w2, b2, w3, b3)

    return out.reshape(b_pad, 1)[:B]


def init_params(key, input_dim, hidden=128):
    """nn.Linear-style U(-1/sqrt(fan_in), 1/sqrt(fan_in)) init.

    Weights are stored transposed vs. PyTorch, i.e. (in_features, out_features);
    the final layer's weight is a (1, hidden) row.  bf16 kernel operands are
    pre-cast once here (perf-review item) alongside the f32 masters.
    """
    k1, k2, k3, k4, k5, k6 = jax.random.split(key, 6)

    def lin(kw, kb, fan_in, fan_out):
        bound = 1.0 / (fan_in ** 0.5)
        w = jax.random.uniform(kw, (fan_in, fan_out), jnp.float32, -bound, bound)
        b = jax.random.uniform(kb, (fan_out,), jnp.float32, -bound, bound)
        return w, b

    w1, b1 = lin(k1, k2, input_dim, hidden)
    w2, b2 = lin(k3, k4, hidden, hidden)
    w3, b3 = lin(k5, k6, hidden, 1)
    w3_row = w3.reshape(1, hidden)
    return {
        # f32 masters (pure-JAX reference / training).
        "w1": w1, "b1": b1.reshape(1, hidden),
        "w2": w2, "b2": b2.reshape(1, hidden),
        "w3": w3_row, "b3": b3,
        # Kernel-ready operands, cast once (not per forward call).
        "w1_bf16": w1.astype(jnp.bfloat16),
        "w2_bf16": w2.astype(jnp.bfloat16),
        # (8, hidden) bf16 with rows 1..7 zero: feeds the MXU layer-3 path.
        "w3_mxu": jnp.zeros((8, hidden), jnp.bfloat16).at[0, :].set(
            w3_row[0].astype(jnp.bfloat16)),
    }


def reference_forward(x, p):
    """Pure-f32 reference of the PyTorch module."""
    h = jnp.maximum(x @ p["w1"] + p["b1"], 0.0)
    h = jnp.maximum(h @ p["w2"] + p["b2"], 0.0)
    return h @ p["w3"].T + p["b3"]


if __name__ == "__main__":
    key = jax.random.PRNGKey(0)
    k_x, k_p = jax.random.split(key)

    B, D = 16, 32                      # small batch, input_dim=32
    x = jax.random.normal(k_x, (B, D), dtype=jnp.float32)
    params = init_params(k_p, D)

    out = jax.block_until_ready(relax_baseline_forward(x, params))
    ref = reference_forward(x, params)

    assert out.shape == (B, 1)
    # bf16 MXU operands (f32 accumulation) round inputs to ~1e-3 relative
    # precision; the tolerance covers that vs. the pure-f32 reference.
    err = float(jnp.max(jnp.abs(out - ref)))
    assert jnp.allclose(out, ref, atol=1e-2, rtol=1e-2), f"max abs err = {err}"

    print("KERNEL_OK")
</pallas_src>

<mosaic_0001>
module attributes {stable_mosaic.version = 11 : i64} {
  func.func @relax_baseline_kernel(%arg0: i32, %arg1: memref<16x32xf32, #tpu.memory_space<vmem>>, %arg2: memref<32x128xbf16, #tpu.memory_space<vmem>>, %arg3: memref<1x128xf32, #tpu.memory_space<vmem>>, %arg4: memref<128x128xbf16, #tpu.memory_space<vmem>>, %arg5: memref<1x128xf32, #tpu.memory_space<vmem>>, %arg6: memref<8x128xbf16, #tpu.memory_space<vmem>>, %arg7: memref<1xf32, #tpu.memory_space<smem>>, %arg8: memref<1x1x16xf32, #tpu.memory_space<vmem>>) attributes {dimension_semantics = [#tpu.dimension_semantics<parallel>], iteration_bounds = array<i64: 1>, scalar_prefetch = 0 : i64, scratch_operands = 0 : i64, tpu.core_type = #tpu.core_type<tc>, window_params = [{transform_indices = @transform_0, window_bounds = array<i64: 16, 32>}, {pipeline_mode = #tpu.pipeline_mode<synchronous>, transform_indices = @transform_1, window_bounds = array<i64: 32, 128>}, {pipeline_mode = #tpu.pipeline_mode<synchronous>, transform_indices = @transform_2, window_bounds = array<i64: 1, 128>}, {pipeline_mode = #tpu.pipeline_mode<synchronous>, transform_indices = @transform_3, window_bounds = array<i64: 128, 128>}, {pipeline_mode = #tpu.pipeline_mode<synchronous>, transform_indices = @transform_4, window_bounds = array<i64: 1, 128>}, {pipeline_mode = #tpu.pipeline_mode<synchronous>, transform_indices = @transform_5, window_bounds = array<i64: 8, 128>}, {transform_indices = @transform_6, window_bounds = array<i64: 1>}, {transform_indices = @transform_7, window_bounds = array<i64: 1, 1, 16>}]} {
    %c0 = arith.constant 0 : index
    %c0_0 = arith.constant 0 : index
    %0 = vector.load %arg1[%c0, %c0_0] : memref<16x32xf32, #tpu.memory_space<vmem>>, vector<16x32xf32>
    %1 = arith.truncf %0 : vector<16x32xf32> to vector<16x32xbf16>
    %c0_1 = arith.constant 0 : index
    %c0_2 = arith.constant 0 : index
    %2 = vector.load %arg2[%c0_1, %c0_2] : memref<32x128xbf16, #tpu.memory_space<vmem>>, vector<32x128xbf16>
    %cst = arith.constant dense<0.000000e+00> : vector<16x128xf32>
    %3 = tpu.matmul %1, %2, %cst {dimension_numbers = #tpu.dot_dimension_numbers<[1], [0], [0], [1], [0, 0, 1, 1], [], []>} : vector<16x32xbf16>, vector<32x128xbf16>, vector<16x128xf32> -> vector<16x128xf32>
    %c0_3 = arith.constant 0 : index
    %c0_4 = arith.constant 0 : index
    %4 = vector.load %arg3[%c0_3, %c0_4] : memref<1x128xf32, #tpu.memory_space<vmem>>, vector<1x128xf32>
    %5 = vector.broadcast %4 : vector<1x128xf32> to vector<16x128xf32>
    %6 = arith.addf %3, %5 : vector<16x128xf32>
    %cst_5 = arith.constant 0.000000e+00 : f32
    %7 = vector.broadcast %cst_5 : f32 to vector<16x128xf32>
    %8 = arith.maximumf %6, %7 : vector<16x128xf32>
    %9 = arith.truncf %8 : vector<16x128xf32> to vector<16x128xbf16>
    %c0_6 = arith.constant 0 : index
    %c0_7 = arith.constant 0 : index
    %10 = vector.load %arg4[%c0_6, %c0_7] : memref<128x128xbf16, #tpu.memory_space<vmem>>, vector<128x128xbf16>
    %cst_8 = arith.constant dense<0.000000e+00> : vector<16x128xf32>
    %11 = tpu.matmul %9, %10, %cst_8 {dimension_numbers = #tpu.dot_dimension_numbers<[1], [0], [0], [1], [0, 0, 1, 1], [], []>} : vector<16x128xbf16>, vector<128x128xbf16>, vector<16x128xf32> -> vector<16x128xf32>
    %c0_9 = arith.constant 0 : index
    %c0_10 = arith.constant 0 : index
    %12 = vector.load %arg5[%c0_9, %c0_10] : memref<1x128xf32, #tpu.memory_space<vmem>>, vector<1x128xf32>
    %13 = vector.broadcast %12 : vector<1x128xf32> to vector<16x128xf32>
    %14 = arith.addf %11, %13 : vector<16x128xf32>
    %cst_11 = arith.constant 0.000000e+00 : f32
    %15 = vector.broadcast %cst_11 : f32 to vector<16x128xf32>
    %16 = arith.maximumf %14, %15 : vector<16x128xf32>
    %c0_12 = arith.constant 0 : index
    %c0_13 = arith.constant 0 : index
    %17 = vector.load %arg6[%c0_12, %c0_13] : memref<8x128xbf16, #tpu.memory_space<vmem>>, vector<8x128xbf16>
    %18 = arith.truncf %16 : vector<16x128xf32> to vector<16x128xbf16>
    %cst_14 = arith.constant dense<0.000000e+00> : vector<8x16xf32>
    %19 = tpu.matmul %17, %18, %cst_14 {dimension_numbers = #tpu.dot_dimension_numbers<[1], [1], [0], [0], [0, 0, 1, 0], [], []>} : vector<8x128xbf16>, vector<16x128xbf16>, vector<8x16xf32> -> vector<8x16xf32>
    %20 = vector.extract_strided_slice %19 {offsets = [0, 0], sizes = [1, 16], strides = [1, 1]} : vector<8x16xf32> to vector<1x16xf32>
    %c0_15 = arith.constant 0 : index
    %21 = memref.load %arg7[%c0_15] : memref<1xf32, #tpu.memory_space<smem>>
    %22 = vector.broadcast %21 : f32 to vector<1x16xf32>
    %23 = arith.addf %20, %22 : vector<1x16xf32>
    %24 = vector.shape_cast %23 : vector<1x16xf32> to vector<1x1x16xf32>
    %c0_16 = arith.constant 0 : index
    %c0_17 = arith.constant 0 : index
    %c0_18 = arith.constant 0 : index
    %25 = vector.load %arg8[%c0_16, %c0_17, %c0_18] : memref<1x1x16xf32, #tpu.memory_space<vmem>>, vector<1x1x16xf32>
    tpu.vector_store %arg8[%c0_16, %c0_17, %c0_18], %24 {strides = array<i32>} : memref<1x1x16xf32, #tpu.memory_space<vmem>>, vector<1x1x16xf32>,
    return
  }
  func.func @transform_0(%arg0: i32) -> (i32, i32) {
    %c0_i32 = arith.constant 0 : i32
    %c0_i32_0 = arith.constant 0 : i32
    return %arg0, %c0_i32 : i32, i32
  }
  func.func @transform_1(%arg0: i32) -> (i32, i32) {
    %c0_i32 = arith.constant 0 : i32
    %c0_i32_0 = arith.constant 0 : i32
    %c0_i32_1 = arith.constant 0 : i32
    return %c0_i32, %c0_i32_0 : i32, i32
  }
  func.func @transform_2(%arg0: i32) -> (i32, i32) {
    %c0_i32 = arith.constant 0 : i32
    %c0_i32_0 = arith.constant 0 : i32
    %c0_i32_1 = arith.constant 0 : i32
    return %c0_i32, %c0_i32_0 : i32, i32
  }
  func.func @transform_3(%arg0: i32) -> (i32, i32) {
    %c0_i32 = arith.constant 0 : i32
    %c0_i32_0 = arith.constant 0 : i32
    %c0_i32_1 = arith.constant 0 : i32
    return %c0_i32, %c0_i32_0 : i32, i32
  }
  func.func @transform_4(%arg0: i32) -> (i32, i32) {
    %c0_i32 = arith.constant 0 : i32
    %c0_i32_0 = arith.constant 0 : i32
    %c0_i32_1 = arith.constant 0 : i32
    return %c0_i32, %c0_i32_0 : i32, i32
  }
  func.func @transform_5(%arg0: i32) -> (i32, i32) {
    %c0_i32 = arith.constant 0 : i32
    %c0_i32_0 = arith.constant 0 : i32
    %c0_i32_1 = arith.constant 0 : i32
    return %c0_i32, %c0_i32_0 : i32, i32
  }
  func.func @transform_6(%arg0: i32) -> i32 {
    %c0_i32 = arith.constant 0 : i32
    %c0_i32_0 = arith.constant 0 : i32
    return %c0_i32 : i32
  }
  func.func @transform_7(%arg0: i32) -> (i32, i32, i32) {
    %c0_i32 = arith.constant 0 : i32
    %c0_i32_0 = arith.constant 0 : i32
    %c0_i32_1 = arith.constant 0 : i32
    return %arg0, %c0_i32, %c0_i32_0 : i32, i32, i32
  }
}

</mosaic_0001>

<llo_original>
// kernel: tpu_custom_call.1
$region0: #{tpu_custom_call.1}
  #allocation0 [shape = 'u32[]', space=smem, size = 0x4, offset = 0x4, fixed_abs, tag = 'smem constant byte address 0x4 - core index']
  #allocation1 [shape = 'u32[144,128]{1,0:T(1,128)}', space=vmem, size = 0x12000, scoped, tag = 'internal scratch']
  #allocation2 [shape = 'f32[1]{0:T(128)S(6)}', space=smem, size = 0x200, scoped, tag = 'scoped memory for tpu_custom_call.1']
  %s0 = inlined_call_operand.hbm [shape: f32[16,32], index: 0, kind: input, shape index: {}]
  %s1 = inlined_call_operand.hbm [shape: bf16[32,128], index: 1, kind: input, shape index: {}]
  %s2 = inlined_call_operand.vmem [shape: f32[1,128], index: 2, kind: input, shape index: {}]
  %s3 = inlined_call_operand.hbm [shape: bf16[128,128], index: 3, kind: input, shape index: {}]
  %s4 = inlined_call_operand.vmem [shape: f32[1,128], index: 4, kind: input, shape index: {}]
  %s5 = inlined_call_operand.vmem [shape: bf16[8,128], index: 5, kind: input, shape index: {}]
  %s6 = inlined_call_operand.<no memory space> [shape: f32[1], index: 6, kind: input, shape index: {}]
  %s7 = inlined_call_operand.hbm [shape: f32[1,1,16], index: 7, kind: output, shape index: {}]
  %s8 = sld [smem:[#allocation0]]
  $region50: #{tpu_custom_call.1} parent=0
    _
  %s10 = ssub.s32 1, %s8
  %s11 = scalar_select 0, %s10, %s8
  %12 = sst [smem:[#allocation2]] %s6
  $region1: #{tpu_custom_call.1} parent=0
    #allocation3 [shape = 'u8[8192]{0}', space=vmem, size = 0x2000, scoped, tag = 'input window, operand 0, single buffered']
    #allocation4 [shape = 's32[1]{0}', space=sflag, size = 0x4, scoped, tag = 'scoped memory for tpu_custom_call.1']
    #allocation5 [shape = 's32[1]{0}', space=sflag, size = 0x4, scoped, tag = 'scoped memory for tpu_custom_call.1']
    #allocation6 [shape = 'u8[8192]{0}', space=vmem, size = 0x2000, scoped, tag = 'input window, operand 1, single buffered']
    #allocation7 [shape = 's32[1]{0}', space=sflag, size = 0x4, scoped, tag = 'scoped memory for tpu_custom_call.1']
    #allocation8 [shape = 'u8[32768]{0}', space=vmem, size = 0x8000, scoped, tag = 'input window, operand 3, single buffered']
    #allocation9 [shape = 'u8[512]{0}', space=vmem, size = 0x400, scoped, tag = 'output window, operand 0, single buffered']
    %13 = vsyncpa [#allocation4], 0
    %14 = vsyncpa [#allocation7], 0
    %15 = vsyncpa [#allocation5], 0
    // Predicated region
    $region2: #{tpu_custom_call.1} parent=1 // pred_check
      _
    $region3: #{tpu_custom_call.1} parent=1 // pred_check_branch
      %17 = sbr.rel (0) target = $region5
    $region4: #{tpu_custom_call.1} parent=1 // pred_region
      %s19 = ssub.s32 256, 256
      %20 = vsyncadd [#allocation4], %s19
      %s21 = sshll.u32 [#allocation3], 4
      %s22 = int_to_ptr.vmem [resolvable:$true] %s21
      %27 = dma.hbm_to_vmem [thread:$0]  %s0, 256, %s22, [#allocation4], 128, 128, 8
    $region5: #{tpu_custom_call.1} parent=1 // pred_fallthru
      _
    // Predicated region
    $region6: #{tpu_custom_call.1} parent=1 // pred_check
      _
    $region7: #{tpu_custom_call.1} parent=1 // pred_check_branch
      %29 = sbr.rel (0) target = $region9
    $region8: #{tpu_custom_call.1} parent=1 // pred_region
      %s31 = ssub.s32 256, 256
      %32 = vsyncadd [#allocation7], %s31
      %s33 = sshll.u32 [#allocation6], 4
      %s34 = int_to_ptr.vmem [resolvable:$true] %s33
      %39 = dma.hbm_to_vmem [thread:$0]  %s1, 256, %s34, [#allocation7], 64, 64, 4
    $region9: #{tpu_custom_call.1} parent=1 // pred_fallthru
      _
    // Predicated region
    $region10: #{tpu_custom_call.1} parent=1 // pred_check
      _
    $region11: #{tpu_custom_call.1} parent=1 // pred_check_branch
      %41 = sbr.rel (0) target = $region13
    $region12: #{tpu_custom_call.1} parent=1 // pred_region
      _
    $region13: #{tpu_custom_call.1} parent=1 // pred_fallthru
      _
    // Predicated region
    $region14: #{tpu_custom_call.1} parent=1 // pred_check
      _
    $region15: #{tpu_custom_call.1} parent=1 // pred_check_branch
      %43 = sbr.rel (0) target = $region17
    $region16: #{tpu_custom_call.1} parent=1 // pred_region
      %s45 = ssub.s32 1024, 1024
      %46 = vsyncadd [#allocation7], %s45
      %s47 = sshll.u32 [#allocation8], 4
      %s48 = int_to_ptr.vmem [resolvable:$true] %s47
      %53 = dma.hbm_to_vmem [thread:$0]  %s3, 1024, %s48, [#allocation7], 64, 64, 4
    $region17: #{tpu_custom_call.1} parent=1 // pred_fallthru
      _
    // Predicated region
    $region18: #{tpu_custom_call.1} parent=1 // pred_check
      _
    $region19: #{tpu_custom_call.1} parent=1 // pred_check_branch
      %55 = sbr.rel (0) target = $region21
    $region20: #{tpu_custom_call.1} parent=1 // pred_region
      _
    $region21: #{tpu_custom_call.1} parent=1 // pred_fallthru
      _
    // Predicated region
    $region22: #{tpu_custom_call.1} parent=1 // pred_check
      _
    $region23: #{tpu_custom_call.1} parent=1 // pred_check_branch
      %57 = sbr.rel (0) target = $region25
    $region24: #{tpu_custom_call.1} parent=1 // pred_region
      _
    $region25: #{tpu_custom_call.1} parent=1 // pred_fallthru
      _
    // Predicated region
    $region26: #{tpu_custom_call.1} parent=1 // pred_check
      _
    $region27: #{tpu_custom_call.1} parent=1 // pred_check_branch
      %59 = sbr.rel (0) target = $region29
    $region28: #{tpu_custom_call.1} parent=1 // pred_region
      _
    $region29: #{tpu_custom_call.1} parent=1 // pred_fallthru
      _
    // Predicated region
    $region30: #{tpu_custom_call.1} parent=1 // pred_check
      _
    $region31: #{tpu_custom_call.1} parent=1 // pred_check_branch
      %61 = sbr.rel (0) target = $region33
    $region32: #{tpu_custom_call.1} parent=1 // pred_region
      %62 = dma.done [#allocation4], 256
    $region33: #{tpu_custom_call.1} parent=1 // pred_fallthru
      _
    // Predicated region
    $region34: #{tpu_custom_call.1} parent=1 // pred_check
      _
    $region35: #{tpu_custom_call.1} parent=1 // pred_check_branch
      %64 = sbr.rel (0) target = $region37
    $region36: #{tpu_custom_call.1} parent=1 // pred_region
      %65 = dma.done [#allocation7], 256
    $region37: #{tpu_custom_call.1} parent=1 // pred_fallthru
      _
    // Predicated region
    $region38: #{tpu_custom_call.1} parent=1 // pred_check
      _
    $region39: #{tpu_custom_call.1} parent=1 // pred_check_branch
      %67 = sbr.rel (0) target = $region41
    $region40: #{tpu_custom_call.1} parent=1 // pred_region
      %68 = dma.done [#allocation7], 1024
    $region41: #{tpu_custom_call.1} parent=1 // pred_fallthru
      _
    %v70 = vld [vmem:[#allocation3] sm:$0xff]
    %v71 = vld [vmem:[#allocation3 + $0x8] sm:$0xff]
    %v72 = vpack.c.bf16 %v71, %v70
    %v73 = vld [vmem:[#allocation6] sm:$0xf]
    %v74 = vld [vmem:[#allocation6 + $0x4] sm:$0xf]
    %v75 = vld [vmem:[#allocation6 + $0x8] sm:$0xf]
    %v76 = vld [vmem:[#allocation6 + $0xc] sm:$0xf]
    %v77 = vld [vmem:[%s2] sm:$0x1]
    %v79 = vlaneseq
    %v80 = vshrl.u32 %v79, 7
    %v81 = vsub.s32 0, %v80
    %v82 = vrot.slane %v77, %v81
    %v88 = vunpack.c.l.b16 %v73
    %v89 = vunpack.c.l.b16 %v74
    %v90 = vunpack.c.l.b16 %v75
    %v91 = vunpack.c.l.b16 %v76
    %v92 = vpack.c.b16 %v89, %v88
    %v93 = vpack.c.b16 %v91, %v90
    %vm96 = vcmask 261120
    %v98 = vsel %vm96, %v72, 0
    %100 = vmatprep.subr.bf16.mxu0 0
    %101 = vmatpush1.bf16.msra.mxu0 %v92
    %102 = vmatprep.subr.bf16.mxu0 0
    %103 = vmatpush1.bf16.msra.mxu0 %v93
    %104 = vmatprep.subr.bf16.mxu0 0
    %105 = vmatpush1.bf16.msra.mxu0 0
    %106 = vmatprep.subr.bf16.mxu0 0
    %107 = vmatpush1.bf16.msra.mxu0 0
    %108 = vmatprep.subr.bf16.mxu0 0
    %109 = vmatpush1.bf16.msra.mxu0 0
    %110 = vmatprep.subr.bf16.mxu0 0
    %111 = vmatpush1.bf16.msra.mxu0 0
    %112 = vmatprep.subr.bf16.mxu0 0
    %113 = vmatpush1.bf16.msra.mxu0 0
    %114 = vmatprep.subr.bf16.mxu0 0
    %115 = vmatpush1.bf16.msra.mxu0 0
    %116 = vmatprep.subr.bf16.mxu0 0
    %117 = vmatpush1.bf16.msra.mxu0 0
    %118 = vmatprep.subr.bf16.mxu0 0
    %119 = vmatpush1.bf16.msra.mxu0 0
    %120 = vmatprep.subr.bf16.mxu0 0
    %121 = vmatpush1.bf16.msra.mxu0 0
    %122 = vmatprep.subr.bf16.mxu0 0
    %123 = vmatpush1.bf16.msra.mxu0 0
    %124 = vmatprep.subr.bf16.mxu0 0
    %125 = vmatpush1.bf16.msra.mxu0 0
    %126 = vmatprep.subr.bf16.mxu0 0
    %127 = vmatpush1.bf16.msra.mxu0 0
    %128 = vmatprep.subr.bf16.mxu0 0
    %129 = vmatpush1.bf16.msra.mxu0 0
    %130 = vmatprep.subr.bf16.mxu0 0
    %131 = vmatpush1.bf16.msra.mxu0 0
    %132 = vmatprep.mubr.bf16.mxu0 0
    %133 = vmatmul.mubr.bf16.gmra.mrb[0].mxu0 %v98
    %v134 = vpop.f32.mrb[0].mxu0
    %v135 = vadd.f32 %v82, %v134
    %v136 = vpop.f32.mrb[0].mxu0
    %v137 = vpop.f32.mrb[0].mxu0
    %v138 = vadd.f32 %v82, %v137
    %v139 = vpop.f32.mrb[0].mxu0
    %140 = vdwg.mxu0
    %v141 = vmax.f32 %v135, 0.0
    %v142 = vmax.f32 %v138, 0.0
    %v143 = vpack.c.bf16 %v142, %v141
    %v144 = vld [vmem:[#allocation8] sm:$0xf]
    %v145 = vld [vmem:[#allocation8 + $0x4] sm:$0xf]
    %v146 = vld [vmem:[#allocation8 + $0x8] sm:$0xf]
    %v147 = vld [vmem:[#allocation8 + $0xc] sm:$0xf]
    %v148 = vld [vmem:[#allocation8 + $0x10] sm:$0xf]
    %v149 = vld [vmem:[#allocation8 + $0x14] sm:$0xf]
    %v150 = vld [vmem:[#allocation8 + $0x18] sm:$0xf]
    %v151 = vld [vmem:[#allocation8 + $0x1c] sm:$0xf]
    %v152 = vld [vmem:[#allocation8 + $0x20] sm:$0xf]
    %v153 = vld [vmem:[#allocation8 + $0x24] sm:$0xf]
    %v154 = vld [vmem:[#allocation8 + $0x28] sm:$0xf]
    %v155 = vld [vmem:[#allocation8 + $0x2c] sm:$0xf]
    %v156 = vld [vmem:[#allocation8 + $0x30] sm:$0xf]
    %v157 = vld [vmem:[#allocation8 + $0x34] sm:$0xf]
    %v158 = vld [vmem:[#allocation8 + $0x38] sm:$0xf]
    %v159 = vld [vmem:[#allocation8 + $0x3c] sm:$0xf]
    %v160 = vld [vmem:[%s4] sm:$0x1]
    %v162 = vlaneseq
    %v163 = vshrl.u32 %v162, 7
    %v164 = vsub.s32 0, %v163
    %v165 = vrot.slane %v160, %v164
    %v183 = vunpack.c.l.b16 %v144
    %v184 = vunpack.c.l.b16 %v145
    %v185 = vunpack.c.l.b16 %v146
    %v186 = vunpack.c.l.b16 %v147
    %v187 = vunpack.c.l.b16 %v148
    %v188 = vunpack.c.l.b16 %v149
    %v189 = vunpack.c.l.b16 %v150
    %v190 = vunpack.c.l.b16 %v151
    %v191 = vunpack.c.l.b16 %v152
    %v192 = vunpack.c.l.b16 %v153
    %v193 = vunpack.c.l.b16 %v154
    %v194 = vunpack.c.l.b16 %v155
    %v195 = vunpack.c.l.b16 %v156
    %v196 = vunpack.c.l.b16 %v157
    %v197 = vunpack.c.l.b16 %v158
    %v198 = vunpack.c.l.b16 %v159
    %v199 = vpack.c.b16 %v184, %v183
    %v200 = vpack.c.b16 %v186, %v185
    %v201 = vpack.c.b16 %v188, %v187
    %v202 = vpack.c.b16 %v190, %v189
    %v203 = vpack.c.b16 %v192, %v191
    %v204 = vpack.c.b16 %v194, %v193
    %v205 = vpack.c.b16 %v196, %v195
    %v206 = vpack.c.b16 %v198, %v197
    %215 = vmatprep.subr.bf16.mxu0 0
    %216 = vmatpush1.bf16.msra.mxu0 %v199
    %217 = vmatprep.subr.bf16.mxu0 0
    %218 = vmatpush1.bf16.msra.mxu0 %v200
    %219 = vmatprep.subr.bf16.mxu0 0
    %220 = vmatpush1.bf16.msra.mxu0 %v201
    %221 = vmatprep.subr.bf16.mxu0 0
    %222 = vmatpush1.bf16.msra.mxu0 %v202
    %223 = vmatprep.subr.bf16.mxu0 0
    %224 = vmatpush1.bf16.msra.mxu0 %v203
    %225 = vmatprep.subr.bf16.mxu0 0
    %226 = vmatpush1.bf16.msra.mxu0 %v204
    %227 = vmatprep.subr.bf16.mxu0 0
    %228 = vmatpush1.bf16.msra.mxu0 %v205
    %229 = vmatprep.subr.bf16.mxu0 0
    %230 = vmatpush1.bf16.msra.mxu0 %v206
    %231 = vmatprep.subr.bf16.mxu0 0
    %232 = vmatpush1.bf16.msra.mxu0 0
    %233 = vmatprep.subr.bf16.mxu0 0
    %234 = vmatpush1.bf16.msra.mxu0 0
    %235 = vmatprep.subr.bf16.mxu0 0
    %236 = vmatpush1.bf16.msra.mxu0 0
    %237 = vmatprep.subr.bf16.mxu0 0
    %238 = vmatpush1.bf16.msra.mxu0 0
    %239 = vmatprep.subr.bf16.mxu0 0
    %240 = vmatpush1.bf16.msra.mxu0 0
    %241 = vmatprep.subr.bf16.mxu0 0
    %242 = vmatpush1.bf16.msra.mxu0 0
    %243 = vmatprep.subr.bf16.mxu0 0
    %244 = vmatpush1.bf16.msra.mxu0 0
    %245 = vmatprep.subr.bf16.mxu0 0
    %246 = vmatpush1.bf16.msra.mxu0 0
    %247 = vmatprep.mubr.bf16.mxu0 0
    %248 = vmatmul.mubr.bf16.gmra.mrb[0].mxu0 %v143
    %v249 = vpop.f32.mrb[0].mxu0
    %v250 = vadd.f32 %v165, %v249
    %v251 = vpop.f32.mrb[0].mxu0
    %v252 = vpop.f32.mrb[0].mxu0
    %v253 = vadd.f32 %v165, %v252
    %v254 = vpop.f32.mrb[0].mxu0
    %255 = vdwg.mxu0
    %v256 = vmax.f32 %v250, 0.0
    %v257 = vmax.f32 %v253, 0.0
    %v258 = vld [vmem:[%s5] sm:$0xf]
    %v259 = vpack.c.bf16 %v257, %v256
    %260 = vmatprep.subr.bf16.mxu0 0
    %261 = vmatpush1.bf16.xpose.msra.mxu0 %v259
    %262 = vmatprep.subr.bf16.mxu0 0
    %263 = vmatpush1.bf16.xpose.msra.mxu0 0
    %264 = vmatprep.subr.bf16.mxu0 0
    %265 = vmatpush1.bf16.xpose.msra.mxu0 0
    %266 = vmatprep.subr.bf16.mxu0 0
    %267 = vmatpush1.bf16.xpose.msra.mxu0 0
    %268 = vmatprep.subr.bf16.mxu0 0
    %269 = vmatpush1.bf16.xpose.msra.mxu0 0
    %270 = vmatprep.subr.bf16.mxu0 0
    %271 = vmatpush1.bf16.xpose.msra.mxu0 0
    %272 = vmatprep.subr.bf16.mxu0 0
    %273 = vmatpush1.bf16.xpose.msra.mxu0 0
    %274 = vmatprep.subr.bf16.mxu0 0
    %275 = vmatpush1.bf16.xpose.msra.mxu0 0
    %276 = vmatprep.subr.bf16.mxu0 0
    %277 = vmatpush1.bf16.xpose.msra.mxu0 0
    %278 = vmatprep.subr.bf16.mxu0 0
    %279 = vmatpush1.bf16.xpose.msra.mxu0 0
    %280 = vmatprep.subr.bf16.mxu0 0
    %281 = vmatpush1.bf16.xpose.msra.mxu0 0
    %282 = vmatprep.subr.bf16.mxu0 0
    %283 = vmatpush1.bf16.xpose.msra.mxu0 0
    %284 = vmatprep.subr.bf16.mxu0 0
    %285 = vmatpush1.bf16.xpose.msra.mxu0 0
    %286 = vmatprep.subr.bf16.mxu0 0
    %287 = vmatpush1.bf16.xpose.msra.mxu0 0
    %288 = vmatprep.subr.bf16.mxu0 0
    %289 = vmatpush1.bf16.xpose.msra.mxu0 0
    %290 = vmatprep.subr.bf16.mxu0 0
    %291 = vmatpush1.bf16.xpose.msra.mxu0 0
    %292 = vmatprep.mubr.bf16.mxu0 0
    %293 = vmatmul.mubr.bf16.gmra.mrb[0].mxu0 %v258
    %v294 = vpop.f32.mrb[0].mxu0
    %v295 = vadd.f32 0.0, %v294
    %v296 = vpop.f32.mrb[0].mxu0
    %v297 = vpop.f32.mrb[0].mxu0
    %v298 = vpop.f32.mrb[0].mxu0
    %299 = vdwg.mxu0
    %s300 = sld [smem:[#allocation2]]
    %v301 = vstv %s300
    %v302 = vadd.f32 %v295, %v301
    %vm303 = vcmask 122880
    %304 = vst.msk [vmem:[#allocation9] sm:$0x1] %vm303, %v302
    // Predicated region
    $region42: #{tpu_custom_call.1} parent=1 // pred_check
      _
    $region43: #{tpu_custom_call.1} parent=1 // pred_check_branch
      %306 = sbr.rel (0) target = $region45
    $region44: #{tpu_custom_call.1} parent=1 // pred_region
      %s308 = ssub.s32 16, 16
      %309 = vsyncadd [#allocation5], %s308
      %s311 = sshll.u32 [#allocation9], 4
      %s312 = int_to_ptr.vmem [resolvable:$true] %s311
      %314 = dma.vmem_to_hbm [thread:$0]  %s312, 16, %s7, [#allocation5]
    $region45: #{tpu_custom_call.1} parent=1 // pred_fallthru
      _
    // Predicated region
    $region46: #{tpu_custom_call.1} parent=1 // pred_check
      _
    $region47: #{tpu_custom_call.1} parent=1 // pred_check_branch
      %316 = sbr.rel (0) target = $region49
    $region48: #{tpu_custom_call.1} parent=1 // pred_region
      %317 = dma.done [#allocation5], 16
    $region49: #{tpu_custom_call.1} parent=1 // pred_fallthru
      _
    %318 = vsyncpa [#allocation4], 1
    %319 = vsyncpa [#allocation7], 1
    %320 = vsyncpa [#allocation5], 1

</llo_original>
